<compile_context>
chip_gen: v7x
topology: tpu7x:2x2x1
jax: 0.10.0
libtpu: 0.0.40
codegen_flags: <defaults>
</compile_context>

<pallas_src>
import functools

import jax
import jax.numpy as jnp
from jax import lax
from jax.experimental import pallas as pl
from jax.experimental.pallas import tpu as pltpu


# ----------------------------------------------------------------------------
# Parameter / constant setup (plain JAX "glue", mirrors the module __init__)
# ----------------------------------------------------------------------------
def positional_encoding(model_dim: int, max_sequence_length: int) -> jnp.ndarray:
    """Exact port of PositionalEncodingLayer.forward()."""
    even_idx = jnp.arange(0, model_dim, 2, dtype=jnp.float32)
    denominator = jnp.power(jnp.float32(10000.0), even_idx / model_dim)
    position = jnp.arange(max_sequence_length, dtype=jnp.float32).reshape(
        max_sequence_length, 1
    )
    even_pe = jnp.sin(position / denominator)              # (S, D/2)
    odd_pe = jnp.cos(position / denominator)               # (S, D/2)
    stacked = jnp.stack([even_pe, odd_pe], axis=2)         # (S, D/2, 2)
    return stacked.reshape(max_sequence_length, model_dim)  # (S, D) interleaved


# ----------------------------------------------------------------------------
# In-kernel helpers
# ----------------------------------------------------------------------------
def _apply_dropout(x, seed_scalar, row_base_u32, dropout_p: float):
    """Inverted dropout with a portable counter-based hash PRNG.

    Uses only 32-bit integer VPU ops (xor/mul/shift), so it lowers on TPU and
    in interpret mode.  The counter is the *global* element index, so the mask
    is independent of the chosen tiling and uncorrelated across tiles.
    """
    k, S, D = x.shape
    r0 = lax.broadcasted_iota(jnp.uint32, (k, S, D), 0)
    r1 = lax.broadcasted_iota(jnp.uint32, (k, S, D), 1)
    r2 = lax.broadcasted_iota(jnp.uint32, (k, S, D), 2)
    row = row_base_u32 + r0 * jnp.uint32(S) + r1
    ctr = row * jnp.uint32(D) + r2
    h = ctr ^ (seed_scalar.astype(jnp.uint32) * jnp.uint32(0x9E3779B1))
    # murmur/xxhash-style finalizer mix
    h = h ^ (h >> jnp.uint32(16))
    h = h * jnp.uint32(0x7FEB352D)
    h = h ^ (h >> jnp.uint32(15))
    h = h * jnp.uint32(0x846CA68B)
    h = h ^ (h >> jnp.uint32(16))
    thr = jnp.uint32(int(round(float(dropout_p) * float(1 << 24))))
    keep = (h >> jnp.uint32(8)) >= thr                       # uniform in [0, 2^24)
    scale = jnp.float32(1.0 / (1.0 - float(dropout_p)))
    return x * jnp.where(keep, scale, jnp.float32(0.0))


# ----------------------------------------------------------------------------
# Fast path: small vocab, VMEM-resident table, one-hot MXU gather
# ----------------------------------------------------------------------------
def _embed_fast_kernel(
    seed_ref,     # SMEM (1,) int32              — PRNG seed (scalar prefetch)
    tok_ref,      # VMEM (k, 1, S) int32         — token ids for this tile
    table_ref,    # VMEM (V, D) float32          — embedding table (resident)
    pe_ref,       # VMEM (S, D) float32          — positional encoding (resident)
    out_ref,      # VMEM (k, S, D) float32       — output tile
    *,
    tile_rows: int,
    dropout_p: float,
    training: bool,
):
    k, _, S = tok_ref.shape
    V, D = table_ref.shape

    tok = tok_ref[...].reshape(k, S)                                   # (k, S)
    onehot = (
        tok[:, :, None] == lax.broadcasted_iota(jnp.int32, (k, S, V), 2)
    ).astype(table_ref.dtype)                                          # (k, S, V)
    emb2d = jnp.dot(
        onehot.reshape(k * S, V), table_ref[...],
        preferred_element_type=jnp.float32,
    )                                                                  # (k*S, D)
    result = emb2d.reshape(k, S, D) + pe_ref[...][None, :, :]          # broadcast PE

    if training and dropout_p > 0.0:
        row_base = (pl.program_id(0) * tile_rows).astype(jnp.uint32)
        result = _apply_dropout(result, seed_ref[0], row_base, dropout_p)

    out_ref[...] = result.astype(out_ref.dtype)


# ----------------------------------------------------------------------------
# Fallback path: large vocab, HBM table, DMA row gather (scalar-prefetched ids)
# ----------------------------------------------------------------------------
def _embed_gather_kernel(
    seed_ref,     # SMEM (1,) int32               — PRNG seed (scalar prefetch)
    tok_ref,      # SMEM (B*S,) int32             — flattened token ids (prefetch)
    table_hbm,    # HBM  (V, D) float32           — embedding table (pl.ANY)
    pe_ref,       # VMEM (S, D) float32           — positional encoding (resident)
    out_ref,      # VMEM (k, S, D) float32        — output tile
    gather_buf,   # VMEM (k*S, D) float32 scratch — gathered rows
    row_sems,     # DMA semaphores (k*S,)
    *,
    tile_rows: int,
    seqs_per_tile: int,
    dropout_p: float,
    training: bool,
):
    i = pl.program_id(0)
    base = i * tile_rows
    S, D = pe_ref.shape
    k = seqs_per_tile

    # Issue all row DMAs, then wait on the *same* copy handles (no dummy-source
    # descriptors).  tile_rows is capped (<=256) so the unroll stays bounded.
    # TODO(synk): double-buffer the gather across grid steps and switch to a
    # partially-unrolled fori_loop for very large tiles.
    copies = []
    for r in range(tile_rows):
        tok = tok_ref[base + r]
        cp = pltpu.make_async_copy(
            table_hbm.at[pl.ds(tok, 1), :],
            gather_buf.at[pl.ds(r, 1), :],
            row_sems.at[r],
        )
        cp.start()
        copies.append(cp)
    for cp in copies:
        cp.wait()

    result = gather_buf[...].reshape(k, S, D) + pe_ref[...][None, :, :]

    if training and dropout_p > 0.0:
        row_base = (i * tile_rows).astype(jnp.uint32)
        result = _apply_dropout(result, seed_ref[0], row_base, dropout_p)

    out_ref[...] = result.astype(out_ref.dtype)


# ----------------------------------------------------------------------------
# Wrapper
# ----------------------------------------------------------------------------
def _vmem_capacity_bytes() -> int:
    try:
        return int(pltpu.get_tpu_info().vmem_capacity_bytes)
    except Exception:
        return 64 << 20  # conservative (v7x-sized) fallback


def sentence_embedding(
    tokens: jnp.ndarray,        # (B, S) int32
    emb_table: jnp.ndarray,     # (V, D) float32
    pos_enc: jnp.ndarray,       # (S, D) float32
    *,
    dropout_p: float = 0.1,
    training: bool = False,
    seed: int = 0,
) -> jnp.ndarray:
    B, S = tokens.shape
    V, D = emb_table.shape
    assert pos_enc.shape == (S, D)
    assert 0.0 <= dropout_p < 1.0
    dtype = emb_table.dtype
    itemsize = jnp.dtype(dtype).itemsize

    # ---- generation-aware VMEM budget (v7x: 64 MiB, v5e/v6e: 128 MiB) -------
    vmem_cap = _vmem_capacity_bytes()
    budget = max(2 << 20, vmem_cap // 4)          # total live VMEM target
    table_bytes = V * D * itemsize
    pe_bytes = S * D * itemsize
    use_vmem_table = table_bytes <= budget // 2   # small-vocab fast path

    # ---- tile sizing: whole sequences per tile, sized from the budget -------
    resident = pe_bytes + (table_bytes if use_vmem_table else 0)
    per_seq_out = S * D * itemsize
    per_seq_tok = S * 4
    per_seq_live = 2 * per_seq_out + 2 * per_seq_tok  # double-buffered blocks
    if not use_vmem_table:
        per_seq_live += per_seq_out                   # gather scratch
    avail = max(per_seq_live, budget - resident)
    max_k = max(1, avail // per_seq_live)
    if not use_vmem_table:
        max_k = min(max_k, max(1, 256 // S))          # bound the DMA unroll
    seqs_per_tile = 1
    for d in range(1, B + 1):                         # largest divisor of B <= max_k
        if B % d == 0 and d <= max_k:
            seqs_per_tile = d
    n_tiles = B // seqs_per_tile
    tile_rows = seqs_per_tile * S

    seed_arr = jnp.array([seed], dtype=jnp.int32)
    cparams = pltpu.CompilerParams(
        dimension_semantics=("parallel",),
        vmem_limit_bytes=int(min(vmem_cap * 3 // 4, 96 << 20)),
    )

    # TODO(synk): for D < 128, fold several rows into one lane-dense (…,128k)
    # output slab to avoid masked partial stores; kept natural (…,S,D) layout
    # here for lowering robustness.

    if use_vmem_table:
        # ------------------ fast path: resident table, MXU one-hot gather ----
        tok3 = tokens.reshape(B, 1, S).astype(jnp.int32)
        kernel = functools.partial(
            _embed_fast_kernel,
            tile_rows=tile_rows,
            dropout_p=float(dropout_p),
            training=bool(training),
        )
        grid_spec = pltpu.PrefetchScalarGridSpec(
            num_scalar_prefetch=1,                     # seed
            grid=(n_tiles,),
            in_specs=[
                pl.BlockSpec((seqs_per_tile, 1, S), lambda i, seed: (i, 0, 0)),
                pl.BlockSpec((V, D), lambda i, seed: (0, 0)),   # table: resident
                pl.BlockSpec((S, D), lambda i, seed: (0, 0)),   # PE: resident
            ],
            out_specs=pl.BlockSpec((seqs_per_tile, S, D), lambda i, seed: (i, 0, 0)),
        )
        bytes_accessed = 4 * B * S + table_bytes + pe_bytes + B * S * D * itemsize
        flops = 2 * B * S * V * D
        out = pl.pallas_call(
            kernel,
            out_shape=jax.ShapeDtypeStruct((B, S, D), dtype),
            grid_spec=grid_spec,
            compiler_params=cparams,
            cost_estimate=pl.CostEstimate(
                flops=flops, transcendentals=0, bytes_accessed=bytes_accessed
            ),
        )(seed_arr, tok3, emb_table, pos_enc)
        return out

    # ---------------------- fallback: HBM table, DMA row gather --------------
    # TODO(synk): chunk the scalar-prefetched token ids for very large B*S
    # (1-D SMEM pads to the next power of two).
    tokens_flat = tokens.reshape(B * S).astype(jnp.int32)
    kernel = functools.partial(
        _embed_gather_kernel,
        tile_rows=tile_rows,
        seqs_per_tile=seqs_per_tile,
        dropout_p=float(dropout_p),
        training=bool(training),
    )
    grid_spec = pltpu.PrefetchScalarGridSpec(
        num_scalar_prefetch=2,                          # seed, flattened token ids
        grid=(n_tiles,),
        in_specs=[
            pl.BlockSpec(memory_space=pl.ANY),                              # table in HBM
            pl.BlockSpec((S, D), lambda i, seed, tok: (0, 0)),              # PE: resident
        ],
        out_specs=pl.BlockSpec((seqs_per_tile, S, D), lambda i, seed, tok: (i, 0, 0)),
        scratch_shapes=[
            pltpu.VMEM((tile_rows, D), dtype),
            pltpu.SemaphoreType.DMA((tile_rows,)),
        ],
    )
    bytes_accessed = 4 * B * S + 2 * B * S * D * itemsize + pe_bytes
    out = pl.pallas_call(
        kernel,
        out_shape=jax.ShapeDtypeStruct((B, S, D), dtype),
        grid_spec=grid_spec,
        compiler_params=cparams,
        cost_estimate=pl.CostEstimate(
            flops=B * S * D, transcendentals=0, bytes_accessed=bytes_accessed
        ),
    )(seed_arr, tokens_flat, emb_table, pos_enc)
    return out


# ----------------------------------------------------------------------------
# Demo / correctness check
# ----------------------------------------------------------------------------
if __name__ == "__main__":
    # Small shapes consistent with the module:
    #   vocab_size=16 (len(language_index)), model_dim=32, max_sequence_length=8
    B, S, D, V = 2, 8, 32, 16

    key = jax.random.PRNGKey(0)
    k_emb, k_tok = jax.random.split(key)

    emb_table = jax.random.normal(k_emb, (V, D), dtype=jnp.float32)  # nn.Embedding init N(0,1)
    pos_enc = positional_encoding(D, S)
    tokens = jax.random.randint(k_tok, (B, S), minval=0, maxval=V, dtype=jnp.int32)

    # Eval-mode forward (dropout is identity, matching model.eval()).
    out = sentence_embedding(tokens, emb_table, pos_enc, dropout_p=0.1, training=False)
    out = jax.block_until_ready(out)

    ref = emb_table[tokens] + pos_enc[None, :, :]
    assert out.shape == (B, S, D)
    assert jnp.allclose(out, ref, atol=1e-5, rtol=1e-5), "eval-mode mismatch vs reference"

    # Training-mode forward: each element is either 0 (dropped) or ref/(1-p).
    p = 0.1
    out_tr = jax.block_until_ready(
        sentence_embedding(tokens, emb_table, pos_enc, dropout_p=p, training=True, seed=123)
    )
    assert out_tr.shape == (B, S, D)
    scaled = ref / (1.0 - p)
    kept_ok = jnp.abs(out_tr - scaled) <= (1e-4 + 1e-4 * jnp.abs(scaled))
    dropped = jnp.abs(out_tr) <= 1e-6
    assert bool(jnp.all(kept_ok | dropped)), "training-mode dropout mismatch"

    print("KERNEL_OK")
</pallas_src>

<mosaic_0001>
module attributes {stable_mosaic.version = 11 : i64} {
  func.func @_embed_fast_kernel(%arg0: i32, %arg1: memref<1xi32, #tpu.memory_space<smem>>, %arg2: memref<2x1x8xi32, #tpu.memory_space<vmem>>, %arg3: memref<16x32xf32, #tpu.memory_space<vmem>>, %arg4: memref<8x32xf32, #tpu.memory_space<vmem>>, %arg5: memref<2x8x32xf32, #tpu.memory_space<vmem>>) attributes {dimension_semantics = [#tpu.dimension_semantics<parallel>], iteration_bounds = array<i64: 1>, scalar_prefetch = 1 : i64, scratch_operands = 0 : i64, tpu.core_type = #tpu.core_type<tc>, window_params = [{transform_indices = @transform_0, window_bounds = array<i64: 2, 1, 8>}, {pipeline_mode = #tpu.pipeline_mode<synchronous>, transform_indices = @transform_1, window_bounds = array<i64: 16, 32>}, {pipeline_mode = #tpu.pipeline_mode<synchronous>, transform_indices = @transform_2, window_bounds = array<i64: 8, 32>}, {transform_indices = @transform_3, window_bounds = array<i64: 2, 8, 32>}]} {
    %c0 = arith.constant 0 : index
    %c0_0 = arith.constant 0 : index
    %c0_1 = arith.constant 0 : index
    %0 = vector.load %arg2[%c0, %c0_0, %c0_1] : memref<2x1x8xi32, #tpu.memory_space<vmem>>, vector<2x1x8xi32>
    %1 = vector.shape_cast %0 : vector<2x1x8xi32> to vector<2x8xi32>
    %2 = vector.shape_cast %1 : vector<2x8xi32> to vector<2x8x1xi32>
    %3 = tpu.iota {dimensions = array<i32: 2>} : vector<2x8x16xi32>
    %4 = vector.broadcast %2 : vector<2x8x1xi32> to vector<2x8x16xi32>
    %5 = arith.cmpi eq, %4, %3 : vector<2x8x16xi32>
    %6 = arith.extui %5 : vector<2x8x16xi1> to vector<2x8x16xi32>
    %7 = arith.sitofp %6 : vector<2x8x16xi32> to vector<2x8x16xf32>
    %8 = vector.shape_cast %7 : vector<2x8x16xf32> to vector<16x16xf32>
    %c0_2 = arith.constant 0 : index
    %c0_3 = arith.constant 0 : index
    %9 = vector.load %arg3[%c0_2, %c0_3] : memref<16x32xf32, #tpu.memory_space<vmem>>, vector<16x32xf32>
    %cst = arith.constant dense<0.000000e+00> : vector<16x32xf32>
    %10 = tpu.matmul %8, %9, %cst {dimension_numbers = #tpu.dot_dimension_numbers<[1], [0], [0], [1], [0, 0, 1, 1], [], []>} : vector<16x16xf32>, vector<16x32xf32>, vector<16x32xf32> -> vector<16x32xf32>
    %11 = vector.shape_cast %10 : vector<16x32xf32> to vector<2x8x32xf32>
    %c0_4 = arith.constant 0 : index
    %c0_5 = arith.constant 0 : index
    %12 = vector.load %arg4[%c0_4, %c0_5] : memref<8x32xf32, #tpu.memory_space<vmem>>, vector<8x32xf32>
    %13 = vector.shape_cast %12 : vector<8x32xf32> to vector<1x8x32xf32>
    %14 = vector.broadcast %13 : vector<1x8x32xf32> to vector<2x8x32xf32>
    %15 = arith.addf %11, %14 : vector<2x8x32xf32>
    %c0_6 = arith.constant 0 : index
    %c0_7 = arith.constant 0 : index
    %c0_8 = arith.constant 0 : index
    %16 = vector.load %arg5[%c0_6, %c0_7, %c0_8] : memref<2x8x32xf32, #tpu.memory_space<vmem>>, vector<2x8x32xf32>
    tpu.vector_store %arg5[%c0_6, %c0_7, %c0_8], %15 {strides = array<i32>} : memref<2x8x32xf32, #tpu.memory_space<vmem>>, vector<2x8x32xf32>,
    return
  }
  func.func @transform_0(%arg0: i32, %arg1: memref<1xi32, #tpu.memory_space<smem>>) -> (i32, i32, i32) {
    %c0_i32 = arith.constant 0 : i32
    %c0_i32_0 = arith.constant 0 : i32
    %c0_i32_1 = arith.constant 0 : i32
    return %arg0, %c0_i32, %c0_i32_0 : i32, i32, i32
  }
  func.func @transform_1(%arg0: i32, %arg1: memref<1xi32, #tpu.memory_space<smem>>) -> (i32, i32) {
    %c0_i32 = arith.constant 0 : i32
    %c0_i32_0 = arith.constant 0 : i32
    %c0_i32_1 = arith.constant 0 : i32
    return %c0_i32, %c0_i32_0 : i32, i32
  }
  func.func @transform_2(%arg0: i32, %arg1: memref<1xi32, #tpu.memory_space<smem>>) -> (i32, i32) {
    %c0_i32 = arith.constant 0 : i32
    %c0_i32_0 = arith.constant 0 : i32
    %c0_i32_1 = arith.constant 0 : i32
    return %c0_i32, %c0_i32_0 : i32, i32
  }
  func.func @transform_3(%arg0: i32, %arg1: memref<1xi32, #tpu.memory_space<smem>>) -> (i32, i32, i32) {
    %c0_i32 = arith.constant 0 : i32
    %c0_i32_0 = arith.constant 0 : i32
    %c0_i32_1 = arith.constant 0 : i32
    return %arg0, %c0_i32, %c0_i32_0 : i32, i32, i32
  }
}

</mosaic_0001>

<llo_original>
// kernel: tpu_custom_call.1
$region0: #{tpu_custom_call.1}
  #allocation0 [shape = 'u32[]', space=smem, size = 0x4, offset = 0x4, fixed_abs, tag = 'smem constant byte address 0x4 - core index']
  #allocation1 [shape = 'u32[144,128]{1,0:T(1,128)}', space=vmem, size = 0x12000, scoped, tag = 'internal scratch']
  #allocation2 [shape = 's32[1]{0}', space=sflag, size = 0x4, scoped, tag = 'scoped memory for tpu_custom_call.1']
  #allocation3 [shape = 's32[1]{0:T(128)S(6)}', space=smem, size = 0x200, scoped, tag = 'prefetched SMEM operand 0']
  %s0 = inlined_call_operand.<no memory space> [shape: s32[1], index: 0, kind: input, shape index: {}]
  %s1 = inlined_call_operand.vmem [shape: s32[2,1,8], index: 1, kind: input, shape index: {}]
  %s2 = inlined_call_operand.hbm [shape: f32[16,32], index: 2, kind: input, shape index: {}]
  %s3 = inlined_call_operand.vmem [shape: f32[8,32], index: 3, kind: input, shape index: {}]
  %s4 = inlined_call_operand.hbm [shape: f32[2,8,32], index: 4, kind: output, shape index: {}]
  %s5 = sld [smem:[#allocation0]]
  $region26: #{tpu_custom_call.1} parent=0
    _
  %s7 = ssub.s32 1, %s5
  %s8 = scalar_select 0, %s7, %s5
  %9 = sst [smem:[#allocation3]] %s0
  $region1: #{tpu_custom_call.1} parent=0
    #allocation4 [shape = 'u8[8192]{0}', space=vmem, size = 0x2000, scoped, tag = 'input window, operand 2, single buffered']
    #allocation5 [shape = 's32[1]{0}', space=sflag, size = 0x4, scoped, tag = 'scoped memory for tpu_custom_call.1']
    #allocation6 [shape = 's32[1]{0}', space=sflag, size = 0x4, scoped, tag = 'scoped memory for tpu_custom_call.1']
    #allocation7 [shape = 'u8[8192]{0}', space=vmem, size = 0x2000, scoped, tag = 'output window, operand 0, single buffered']
    %10 = vsyncpa [#allocation5], 0
    %11 = vsyncpa [#allocation6], 0
    // Predicated region
    $region2: #{tpu_custom_call.1} parent=1 // pred_check
      _
    $region3: #{tpu_custom_call.1} parent=1 // pred_check_branch
      %13 = sbr.rel (0) target = $region5
    $region4: #{tpu_custom_call.1} parent=1 // pred_region
      _
    $region5: #{tpu_custom_call.1} parent=1 // pred_fallthru
      _
    // Predicated region
    $region6: #{tpu_custom_call.1} parent=1 // pred_check
      _
    $region7: #{tpu_custom_call.1} parent=1 // pred_check_branch
      %15 = sbr.rel (0) target = $region9
    $region8: #{tpu_custom_call.1} parent=1 // pred_region
      %s17 = ssub.s32 256, 256
      %18 = vsyncadd [#allocation5], %s17
      %s19 = sshll.u32 [#allocation4], 4
      %s20 = int_to_ptr.vmem [resolvable:$true] %s19
      %25 = dma.hbm_to_vmem [thread:$0]  %s2, 256, %s20, [#allocation5], 128, 128, 8
    $region9: #{tpu_custom_call.1} parent=1 // pred_fallthru
      _
    // Predicated region
    $region10: #{tpu_custom_call.1} parent=1 // pred_check
      _
    $region11: #{tpu_custom_call.1} parent=1 // pred_check_branch
      %27 = sbr.rel (0) target = $region13
    $region12: #{tpu_custom_call.1} parent=1 // pred_region
      _
    $region13: #{tpu_custom_call.1} parent=1 // pred_fallthru
      _
    // Predicated region
    $region14: #{tpu_custom_call.1} parent=1 // pred_check
      _
    $region15: #{tpu_custom_call.1} parent=1 // pred_check_branch
      %29 = sbr.rel (0) target = $region17
    $region16: #{tpu_custom_call.1} parent=1 // pred_region
      %30 = dma.done [#allocation5], 256
    $region17: #{tpu_custom_call.1} parent=1 // pred_fallthru
      _
    %v31 = vld [vmem:[%s1] sm:$0x1]
    %v32 = vld [vmem:[%s1 + $0x1] sm:$0x1]
    %v33 = vlaneseq
    %v34 = vshrl.u32 %v33, 7
    %v35 = vsub.s32 0, %v34
    %v36 = vrot.slane %v31, %v35
    %38 = vbcast.lane.b32.xlu0 %v36, 256
    %v39 = vpop.permute.xlu0 %38
    %v40 = vlaneseq
    %v41 = vshrl.u32 %v40, 7
    %v42 = vsub.s32 0, %v41
    %v43 = vrot.slane %v32, %v42
    %45 = vbcast.lane.b32.xlu0 %v43, 256
    %v46 = vpop.permute.xlu0 %45
    %v47 = vlaneseq
    %v48 = vand.u32 %v47, 127
    %vm49 = vcmp.eq.s32.totalorder %v39, %v48
    %vm50 = vcmp.eq.s32.totalorder %v46, %v48
    %v51 = vsel %vm49, 1, 0
    %v52 = vsel %vm50, 1, 0
    %v53 = vcvt.s32.f32 %v51
    %v54 = vcvt.s32.f32 %v52
    %v55 = vld [vmem:[#allocation4] sm:$0xff]
    %v56 = vld [vmem:[#allocation4 + $0x8] sm:$0xff]
    %vm57 = vcmask 130048
    %v59 = vsel %vm57, %v53, 0
    %v62 = vsel %vm57, %v54, 0
    %64 = vmatprep.subr.mxu0 0.0
    %65 = vmatpush1.msra.mxu0 %v55
    %66 = vmatprep.subr.mxu0 0.0
    %67 = vmatpush1.msra.mxu0 %v56
    %68 = vmatprep.subr.mxu0 0.0
    %69 = vmatpush1.msra.mxu0 0.0
    %70 = vmatprep.subr.mxu0 0.0
    %71 = vmatpush1.msra.mxu0 0.0
    %72 = vmatprep.subr.mxu0 0.0
    %73 = vmatpush1.msra.mxu0 0.0
    %74 = vmatprep.subr.mxu0 0.0
    %75 = vmatpush1.msra.mxu0 0.0
    %76 = vmatprep.subr.mxu0 0.0
    %77 = vmatpush1.msra.mxu0 0.0
    %78 = vmatprep.subr.mxu0 0.0
    %79 = vmatpush1.msra.mxu0 0.0
    %80 = vmatprep.subr.mxu0 0.0
    %81 = vmatpush1.msra.mxu0 0.0
    %82 = vmatprep.subr.mxu0 0.0
    %83 = vmatpush1.msra.mxu0 0.0
    %84 = vmatprep.subr.mxu0 0.0
    %85 = vmatpush1.msra.mxu0 0.0
    %86 = vmatprep.subr.mxu0 0.0
    %87 = vmatpush1.msra.mxu0 0.0
    %88 = vmatprep.subr.mxu0 0.0
    %89 = vmatpush1.msra.mxu0 0.0
    %90 = vmatprep.subr.mxu0 0.0
    %91 = vmatpush1.msra.mxu0 0.0
    %92 = vmatprep.subr.mxu0 0.0
    %93 = vmatpush1.msra.mxu0 0.0
    %94 = vmatprep.subr.mxu0 0.0
    %95 = vmatpush1.msra.mxu0 0.0
    %96 = vmatprep.subr.mxu0 0.0
    %97 = vmatpush1.msra.mxu0 0.0
    %98 = vmatprep.subr.mxu0 0.0
    %99 = vmatpush1.msra.mxu0 0.0
    %100 = vmatprep.subr.mxu0 0.0
    %101 = vmatpush1.msra.mxu0 0.0
    %102 = vmatprep.subr.mxu0 0.0
    %103 = vmatpush1.msra.mxu0 0.0
    %104 = vmatprep.subr.mxu0 0.0
    %105 = vmatpush1.msra.mxu0 0.0
    %106 = vmatprep.subr.mxu0 0.0
    %107 = vmatpush1.msra.mxu0 0.0
    %108 = vmatprep.subr.mxu0 0.0
    %109 = vmatpush1.msra.mxu0 0.0
    %110 = vmatprep.subr.mxu0 0.0
    %111 = vmatpush1.msra.mxu0 0.0
    %112 = vmatprep.subr.mxu0 0.0
    %113 = vmatpush1.msra.mxu0 0.0
    %114 = vmatprep.subr.mxu0 0.0
    %115 = vmatpush1.msra.mxu0 0.0
    %116 = vmatprep.subr.mxu0 0.0
    %117 = vmatpush1.msra.mxu0 0.0
    %118 = vmatprep.subr.mxu0 0.0
    %119 = vmatpush1.msra.mxu0 0.0
    %120 = vmatprep.subr.mxu0 0.0
    %121 = vmatpush1.msra.mxu0 0.0
    %122 = vmatprep.subr.mxu0 0.0
    %123 = vmatpush1.msra.mxu0 0.0
    %124 = vmatprep.subr.mxu0 0.0
    %125 = vmatpush1.msra.mxu0 0.0
    %126 = vmatprep.subr.mxu0 0.0
    %127 = vmatpush1.msra.mxu0 0.0
    %128 = vmatprep.mubr.f32.mxu0 0.0
    %129 = vmatmul.mubr.f32.gmra.mrb[0].mxu0 %v59
    %v130 = vpop.f32.mrb[0].mxu0
    %v131 = vadd.f32 0.0, %v130
    %v132 = vpop.f32.mrb[0].mxu0
    %133 = vmatprep.mubr.f32.mxu0 0.0
    %134 = vmatmul.mubr.f32.gmra.mrb[0].mxu0 %v62
    %v135 = vpop.f32.mrb[0].mxu0
    %v136 = vadd.f32 0.0, %v135
    %v137 = vpop.f32.mrb[0].mxu0
    %138 = vdwg.mxu0
    %v139 = vld [vmem:[%s3] sm:$0xff]
    %v140 = vadd.f32 %v131, %v139
    %v141 = vadd.f32 %v136, %v139
    %vm142 = vcmask 261120
    %143 = vst.msk [vmem:[#allocation7] sm:$0xff] %vm142, %v140
    %144 = vst.msk [vmem:[#allocation7 + $0x8] sm:$0xff] %vm142, %v141
    // Predicated region
    $region18: #{tpu_custom_call.1} parent=1 // pred_check
      _
    $region19: #{tpu_custom_call.1} parent=1 // pred_check_branch
      %146 = sbr.rel (0) target = $region21
    $region20: #{tpu_custom_call.1} parent=1 // pred_region
      %s148 = ssub.s32 256, 256
      %149 = vsyncadd [#allocation6], %s148
      %s150 = sshll.u32 [#allocation7], 4
      %s151 = int_to_ptr.vmem [resolvable:$true] %s150
      %156 = dma.vmem_to_hbm [thread:$0]  %s151, 256, %s4, [#allocation6], 128, 128, 8
    $region21: #{tpu_custom_call.1} parent=1 // pred_fallthru
      _
    // Predicated region
    $region22: #{tpu_custom_call.1} parent=1 // pred_check
      _
    $region23: #{tpu_custom_call.1} parent=1 // pred_check_branch
      %158 = sbr.rel (0) target = $region25
    $region24: #{tpu_custom_call.1} parent=1 // pred_region
      %159 = dma.done [#allocation6], 256
    $region25: #{tpu_custom_call.1} parent=1 // pred_fallthru
      _
    %160 = vsyncpa [#allocation5], 1
    %161 = vsyncpa [#allocation6], 1

</llo_original>
